<compile_context>
chip_gen: v6e
topology: v6e:2x2x1
jax: 0.10.0
libtpu: 0.0.40
codegen_flags: <defaults>
</compile_context>

<pallas_src>
import functools

import jax
import jax.numpy as jnp
import numpy as np
from jax.experimental import pallas as pl
from jax.experimental.pallas import tpu as pltpu

EMBED_DIM = 64
OUT_CH = 32
KSIZE = 3


def _round_up(x, m):
    return -(-x // m) * m


def _cdiv(a, b):
    return -(-a // b)


def _chip_config():
    """Per-chip tiling budgets (review items 5-7)."""
    try:
        info = pltpu.get_tpu_info()
        vmem_cap = int(getattr(info, "vmem_capacity_bytes", 0)) or (64 << 20)
    except Exception:          # unknown backend / API drift -> conservative
        vmem_cap = 64 << 20
    if vmem_cap >= (96 << 20):
        # v5e / v6e: 128 MiB VMEM, one TensorCore.
        return dict(budget=32 << 20, tn_max=1024, min_steps=2,
                    even_steps=False, vmem_limit=64 << 20)
    # v7x-class (64 MiB VMEM, two TensorCores) or unknown: smaller tiles and an
    # even, >= 4-step grid so both cores keep a double-buffered pipeline.
    return dict(budget=16 << 20, tn_max=512, min_steps=4,
                even_steps=True, vmem_limit=48 << 20)


def _pick_tn(n_rows, lc, cfg):
    """Batch-tile size: as large as the per-step VMEM budget allows (amortizes
    the ~0.35 us per-grid-step pipeline overhead) while keeping the
    chip-dependent grid-step floor (best effort for tiny inputs)."""
    # Conservative per-row working set (f32): double-buffered input + loaded
    # copy, (Lc, 96) matmul output, tap slices + shifted sum, output buffers.
    floats_per_row = (3 * lc * EMBED_DIM            # input (2x buffered) + load
                      + lc * KSIZE * OUT_CH         # matmul output z
                      + 4 * lc * OUT_CH             # tap slices + shifted sum
                      + 4 * OUT_CH)                 # reduced result + out bufs
    bytes_per_row = 4 * floats_per_row
    tn_cap = max(8, min(cfg["tn_max"], cfg["budget"] // bytes_per_row))
    n_steps = max(cfg["min_steps"], _cdiv(n_rows, tn_cap))
    if cfg["even_steps"] and n_steps % 2:
        n_steps += 1                                 # balance v7x's two cores
    tn = _round_up(max(1, _cdiv(n_rows, n_steps)), 8)
    return int(max(8, min(tn, _round_up(tn_cap, 8))))


def _char_cnn_kernel(x_ref, w_ref, b_ref, o_ref, *, true_len):
    """x_ref: (tn, Lc, 64) raw char block (channels last, NO halo in HBM).
       w_ref: (64, 96) = [W_k0 | W_k1 | W_k2] conv taps side by side.
       b_ref: (1, 32) conv bias.         o_ref: (tn, 32) pooled features."""
    x = x_ref[...]
    tn, lc, _ = x.shape
    L = true_len                    # static: # of real char positions (<= lc)

    # Matmul-first conv: one K=64, N=96 MXU matmul on the unshifted block.
    z = jnp.dot(x.reshape(tn * lc, EMBED_DIM), w_ref[...],
                preferred_element_type=jnp.float32)
    z = z.reshape(tn, lc, KSIZE * OUT_CH)
    # z[:, p, k*32:(k+1)*32] == x[:, p, :] @ W_k, hence
    # conv[l] = z[l-1, 0:32] + z[l, 32:64] + z[l+1, 64:96]   (zero outside chars)

    # Interior positions l = 1 .. lc-2: shifted 32-lane slices of z (no im2col).
    interior = (z[:, 0:lc - 2, 0:OUT_CH]
                + z[:, 1:lc - 1, OUT_CH:2 * OUT_CH]
                + z[:, 2:lc, 2 * OUT_CH:3 * OUT_CH])           # (tn, lc-2, 32)
    if L < lc:
        # Char axis was padded up to a sublane multiple: mask padded positions
        # so zero-pad chars can never leak a spurious value into the max.
        pos = jax.lax.broadcasted_iota(jnp.int32, (1, lc - 2, OUT_CH), 1) + 1
        interior = jnp.where(pos < L, interior, -jnp.inf)
    m = jnp.max(interior, axis=1)                              # (tn, 32)

    # l = 0 : left "same"-conv halo is zero.
    m = jnp.maximum(m, jnp.max(z[:, 0:1, OUT_CH:2 * OUT_CH]
                               + z[:, 1:2, 2 * OUT_CH:3 * OUT_CH], axis=1))
    # l = lc-1 is a real position (right halo zero) only when no char padding.
    if L == lc:
        m = jnp.maximum(m, jnp.max(z[:, lc - 2:lc - 1, 0:OUT_CH]
                                   + z[:, lc - 1:lc, OUT_CH:2 * OUT_CH], axis=1))

    # Bias + ReLU AFTER the max (monotone => identical to relu(conv+b) per
    # position followed by the max, as the PyTorch module computes it).
    o_ref[...] = jnp.maximum(m + b_ref[...], 0.0)


def char_cnn_conv_relu_max(x_ncw, w_oik, bias):
    """x_ncw: (N, 64, L) float32 in PyTorch conv1d NCW layout.
    Returns (N, 32) float32 = max over chars of relu(conv1d(x, padding=1))."""
    N, E, L = x_ncw.shape
    assert E == EMBED_DIM and w_oik.shape == (OUT_CH, EMBED_DIM, KSIZE)

    cfg = _chip_config()
    Lc = _round_up(max(L, 1), 8)           # sublane-align the char axis
    tn = _pick_tn(N, Lc, cfg)
    n_pad = (-N) % tn

    # Single fused relayout: NCW->NLC transpose + batch pad (+ char pad only if
    # L % 8 != 0).  No "same"-conv halo is materialized in HBM any more.
    x = jnp.pad(jnp.swapaxes(x_ncw, 1, 2),
                ((0, n_pad), (0, Lc - L), (0, 0))).astype(jnp.float32)
    Np = N + n_pad

    # PyTorch (O=32, I=64, K=3) -> (I, K*O) = (64, 96): tap k at cols k*32:(k+1)*32.
    w96 = jnp.transpose(w_oik, (1, 2, 0)).reshape(
        EMBED_DIM, KSIZE * OUT_CH).astype(jnp.float32)
    b2d = bias.reshape(1, OUT_CH).astype(jnp.float32)

    out = pl.pallas_call(
        functools.partial(_char_cnn_kernel, true_len=L),
        out_shape=jax.ShapeDtypeStruct((Np, OUT_CH), jnp.float32),
        grid_spec=pltpu.PrefetchScalarGridSpec(
            num_scalar_prefetch=0,
            grid=(Np // tn,),
            in_specs=[
                pl.BlockSpec((tn, Lc, EMBED_DIM), lambda i: (i, 0, 0)),
                pl.BlockSpec((EMBED_DIM, KSIZE * OUT_CH), lambda i: (0, 0)),
                pl.BlockSpec((1, OUT_CH), lambda i: (0, 0)),
            ],
            out_specs=pl.BlockSpec((tn, OUT_CH), lambda i: (i, 0)),
        ),
        compiler_params=pltpu.CompilerParams(
            dimension_semantics=("parallel",),
            vmem_limit_bytes=cfg["vmem_limit"],
        ),
    )(x, w96, b2d)

    return out[:N]


def character_cnn_forward(char_inputs, emb_table, conv_w, conv_b):
    """Reproduces Character_CNN.forward exactly, including the module's
    permute(0, 3, 1, 2) + reshape(B*W, 64, C) scramble of the embedding axis."""
    B, W, C = char_inputs.shape
    ids = char_inputs.astype(jnp.int32)
    # TODO(synk): move this gather into the kernel (VMEM-resident embedding
    # table + per-tile int32 ids) to cut kernel-input HBM bytes ~70x; the
    # permute/reshape scramble below makes it a data-dependent 2-D gather.
    char_embeds = emb_table[ids]                             # (B, W, C, 64)
    char_embeds = jnp.transpose(char_embeds, (0, 3, 1, 2))   # (B, 64, W, C)
    x = char_embeds.reshape(B * W, EMBED_DIM, C)             # (B*W, 64, C)
    feats = char_cnn_conv_relu_max(x, conv_w, conv_b)        # (B*W, 32)
    return feats.reshape(B, W, OUT_CH)


def _reference_forward(char_inputs, emb_table, conv_w, conv_b):
    B, W, C = char_inputs.shape
    e = emb_table[char_inputs.astype(jnp.int32)]
    e = jnp.transpose(e, (0, 3, 1, 2)).reshape(B * W, EMBED_DIM, C)
    y = jax.lax.conv_general_dilated(
        e, conv_w, window_strides=(1,), padding=((1, 1),),
        dimension_numbers=("NCH", "OIH", "NCH"))
    y = y + conv_b[None, :, None]
    y = jnp.maximum(y, 0.0)
    y = y.reshape(B, W, OUT_CH, -1)
    return jnp.max(y, axis=-1)


if __name__ == "__main__":
    key = jax.random.PRNGKey(0)
    k_emb, k_w, k_b, k_in = jax.random.split(key, 4)

    char_vocab_size = 50
    B, W, C = 2, 8, 16   # batch, word_seq_len, char_seq_len

    # Deterministic parameter init (padding_idx=0 -> embedding row 0 is zeros).
    emb_table = jax.random.normal(k_emb, (char_vocab_size, EMBED_DIM),
                                  dtype=jnp.float32)
    emb_table = emb_table.at[0].set(0.0)
    conv_w = 0.05 * jax.random.normal(k_w, (OUT_CH, EMBED_DIM, KSIZE),
                                      dtype=jnp.float32)
    conv_b = 0.05 * jax.random.normal(k_b, (OUT_CH,), dtype=jnp.float32)

    char_inputs = jax.random.randint(k_in, (B, W, C), 0, char_vocab_size,
                                     dtype=jnp.int32)

    fwd = jax.jit(character_cnn_forward)
    out = jax.block_until_ready(fwd(char_inputs, emb_table, conv_w, conv_b))

    ref = jax.block_until_ready(
        jax.jit(_reference_forward)(char_inputs, emb_table, conv_w, conv_b))

    assert out.shape == (B, W, OUT_CH)
    np.testing.assert_allclose(np.asarray(out), np.asarray(ref),
                               rtol=1e-5, atol=1e-5)
    print("KERNEL_OK")
</pallas_src>

<mosaic_0001>
module attributes {stable_mosaic.version = 11 : i64} {
  func.func @_char_cnn_kernel(%arg0: i32, %arg1: memref<8x16x64xf32, #tpu.memory_space<vmem>>, %arg2: memref<64x96xf32, #tpu.memory_space<vmem>>, %arg3: memref<1x32xf32, #tpu.memory_space<vmem>>, %arg4: memref<8x32xf32, #tpu.memory_space<vmem>>) attributes {dimension_semantics = [#tpu.dimension_semantics<parallel>], iteration_bounds = array<i64: 2>, scalar_prefetch = 0 : i64, scratch_operands = 0 : i64, tpu.core_type = #tpu.core_type<tc>, window_params = [{transform_indices = @transform_0, window_bounds = array<i64: 8, 16, 64>}, {pipeline_mode = #tpu.pipeline_mode<synchronous>, transform_indices = @transform_1, window_bounds = array<i64: 64, 96>}, {pipeline_mode = #tpu.pipeline_mode<synchronous>, transform_indices = @transform_2, window_bounds = array<i64: 1, 32>}, {transform_indices = @transform_3, window_bounds = array<i64: 8, 32>}]} {
    %c0 = arith.constant 0 : index
    %c0_0 = arith.constant 0 : index
    %c0_1 = arith.constant 0 : index
    %0 = vector.load %arg1[%c0, %c0_0, %c0_1] : memref<8x16x64xf32, #tpu.memory_space<vmem>>, vector<8x16x64xf32>
    %1 = vector.shape_cast %0 : vector<8x16x64xf32> to vector<128x64xf32>
    %c0_2 = arith.constant 0 : index
    %c0_3 = arith.constant 0 : index
    %2 = vector.load %arg2[%c0_2, %c0_3] : memref<64x96xf32, #tpu.memory_space<vmem>>, vector<64x96xf32>
    %cst = arith.constant dense<0.000000e+00> : vector<128x96xf32>
    %3 = tpu.matmul %1, %2, %cst {dimension_numbers = #tpu.dot_dimension_numbers<[1], [0], [0], [1], [0, 0, 1, 1], [], []>} : vector<128x64xf32>, vector<64x96xf32>, vector<128x96xf32> -> vector<128x96xf32>
    %4 = vector.shape_cast %3 : vector<128x96xf32> to vector<8x16x96xf32>
    %5 = vector.extract_strided_slice %4 {offsets = [0, 0, 0], sizes = [8, 14, 32], strides = [1, 1, 1]} : vector<8x16x96xf32> to vector<8x14x32xf32>
    %6 = vector.extract_strided_slice %4 {offsets = [0, 1, 32], sizes = [8, 14, 32], strides = [1, 1, 1]} : vector<8x16x96xf32> to vector<8x14x32xf32>
    %7 = arith.addf %5, %6 : vector<8x14x32xf32>
    %8 = vector.extract_strided_slice %4 {offsets = [0, 2, 64], sizes = [8, 14, 32], strides = [1, 1, 1]} : vector<8x16x96xf32> to vector<8x14x32xf32>
    %9 = arith.addf %7, %8 : vector<8x14x32xf32>
    %cst_4 = arith.constant dense<0xFF800000> : vector<8x32xf32>
    %10 = vector.multi_reduction <maximumf>, %9, %cst_4 [1] : vector<8x14x32xf32> to vector<8x32xf32>
    %11 = vector.extract_strided_slice %4 {offsets = [0, 0, 32], sizes = [8, 1, 32], strides = [1, 1, 1]} : vector<8x16x96xf32> to vector<8x1x32xf32>
    %12 = vector.extract_strided_slice %4 {offsets = [0, 1, 64], sizes = [8, 1, 32], strides = [1, 1, 1]} : vector<8x16x96xf32> to vector<8x1x32xf32>
    %13 = arith.addf %11, %12 : vector<8x1x32xf32>
    %cst_5 = arith.constant dense<0xFF800000> : vector<8x32xf32>
    %14 = vector.multi_reduction <maximumf>, %13, %cst_5 [1] : vector<8x1x32xf32> to vector<8x32xf32>
    %15 = arith.maximumf %10, %14 : vector<8x32xf32>
    %16 = vector.extract_strided_slice %4 {offsets = [0, 14, 0], sizes = [8, 1, 32], strides = [1, 1, 1]} : vector<8x16x96xf32> to vector<8x1x32xf32>
    %17 = vector.extract_strided_slice %4 {offsets = [0, 15, 32], sizes = [8, 1, 32], strides = [1, 1, 1]} : vector<8x16x96xf32> to vector<8x1x32xf32>
    %18 = arith.addf %16, %17 : vector<8x1x32xf32>
    %cst_6 = arith.constant dense<0xFF800000> : vector<8x32xf32>
    %19 = vector.multi_reduction <maximumf>, %18, %cst_6 [1] : vector<8x1x32xf32> to vector<8x32xf32>
    %20 = arith.maximumf %15, %19 : vector<8x32xf32>
    %c0_7 = arith.constant 0 : index
    %c0_8 = arith.constant 0 : index
    %21 = vector.load %arg3[%c0_7, %c0_8] : memref<1x32xf32, #tpu.memory_space<vmem>>, vector<1x32xf32>
    %22 = vector.broadcast %21 : vector<1x32xf32> to vector<8x32xf32>
    %23 = arith.addf %20, %22 : vector<8x32xf32>
    %cst_9 = arith.constant 0.000000e+00 : f32
    %24 = vector.broadcast %cst_9 : f32 to vector<8x32xf32>
    %25 = arith.maximumf %23, %24 : vector<8x32xf32>
    %c0_10 = arith.constant 0 : index
    %c0_11 = arith.constant 0 : index
    %26 = vector.load %arg4[%c0_10, %c0_11] : memref<8x32xf32, #tpu.memory_space<vmem>>, vector<8x32xf32>
    tpu.vector_store %arg4[%c0_10, %c0_11], %25 {strides = array<i32>} : memref<8x32xf32, #tpu.memory_space<vmem>>, vector<8x32xf32>,
    return
  }
  func.func @transform_0(%arg0: i32) -> (i32, i32, i32) {
    %c0_i32 = arith.constant 0 : i32
    %c0_i32_0 = arith.constant 0 : i32
    %c0_i32_1 = arith.constant 0 : i32
    return %arg0, %c0_i32, %c0_i32_0 : i32, i32, i32
  }
  func.func @transform_1(%arg0: i32) -> (i32, i32) {
    %c0_i32 = arith.constant 0 : i32
    %c0_i32_0 = arith.constant 0 : i32
    %c0_i32_1 = arith.constant 0 : i32
    return %c0_i32, %c0_i32_0 : i32, i32
  }
  func.func @transform_2(%arg0: i32) -> (i32, i32) {
    %c0_i32 = arith.constant 0 : i32
    %c0_i32_0 = arith.constant 0 : i32
    %c0_i32_1 = arith.constant 0 : i32
    return %c0_i32, %c0_i32_0 : i32, i32
  }
  func.func @transform_3(%arg0: i32) -> (i32, i32) {
    %c0_i32 = arith.constant 0 : i32
    %c0_i32_0 = arith.constant 0 : i32
    return %arg0, %c0_i32 : i32, i32
  }
}

</mosaic_0001>

<llo_original>
// kernel: character_cnn_forward.1
$region0: #{character_cnn_forward.1}
  #allocation0 [shape = 'u32[]', space=smem, size = 0x4, offset = 0x4, fixed_abs, tag = 'smem constant byte address 0x4 - core index']
  #allocation1 [shape = 'u32[144,128]{1,0:T(1,128)}', space=vmem, size = 0x12000, scoped, tag = 'internal scratch']
  %s0 = inlined_call_operand.vmem [shape: f32[16,16,64], index: 0, kind: input, shape index: {}]
  %s1 = inlined_call_operand.vmem [shape: f32[64,96], index: 1, kind: input, shape index: {}]
  %s2 = inlined_call_operand.vmem [shape: f32[1,32], index: 2, kind: input, shape index: {}]
  %s3 = inlined_call_operand.hbm [shape: f32[16,32], index: 3, kind: output, shape index: {}]
  %s4 = sld [smem:[#allocation0]]
  $region45: #{character_cnn_forward.1} parent=0
    _
  %s6 = ssub.s32 1, %s4
  %s7 = scalar_select 0, %s6, %s4
  $region1: #{character_cnn_forward.1} parent=0
    #allocation2 [shape = 'u8[8192]{0}', space=vmem, size = 0x2000, scoped, tag = 'output window, operand 0']
    #allocation3 [shape = 's32[2]{0}', space=sflag, size = 0x8, scoped, tag = 'scoped memory for character_cnn_forward.1']
    %8 = vsyncpa [#allocation3], 0
    %s9 = scalar_lea.sflag [#allocation3], 1
    %10 = vsyncpa %s9, 0
    loop: start=0, step=1, limit=4
    $region2: #{character_cnn_forward.1} parent=1 // loop_pre_header
      _
    $region3: #{character_cnn_forward.1} parent=1 // loop_header
      %s12 = sphi 0, %s16
      %p13 = scmp.ge.s32.totalorder %s12, 4
      %s22 = sphi 0, %s24
      %s25 = sphi 0, %s22
      %s26 = sphi 0, %s25
      %s42 = sphi 0, %s26
      %s46 = sphi 0, %s46
      %s48 = sphi 0, %s46
      %s49 = sphi 0, %s48
      %s63 = sphi 0, %s49
      %s67 = sphi 0, %s67
      %s69 = sphi 0, %s67
      %s70 = sphi 0, %s69
      %s84 = sphi 0, %s70
      %s90 = sphi 0, %s92
      %s93 = sphi 0, %s90
      %s94 = sphi 0, %s93
      %s110 = sphi 0, %s94
    $region4: #{character_cnn_forward.1} parent=1 // loop_header_branch
      %15 = sbr.rel (%p13) target = $region8
    $region5: #{character_cnn_forward.1} parent=1 // loop_body
      %s17 = ssub.s32 %s12, 1
      %s18 = ssub.s32 %s12, 2
      %s19 = sadd.s32 %s12, 1
      %s20 = ssub.s32 %s12, %s19
      %p21 = scmp.eq.s32.totalorder %s20, 0
      %s23 = sadd.s32 %s22, 1
      %s24 = scalar_select %p21, %s22, %s23
      %p27 = pneg %p21
      %p28 = scmp.eq.s32.totalorder %s12, 1
      %p29 = por %p27, %p28
      %p30 = scmp.ne.s32.totalorder %s22, %s25
      %p31 = scmp.eq.s32.totalorder %s12, 0
      %p32 = por %p30, %p31
      %p33 = scmp.ne.s32.totalorder %s22, %s25
      %p34 = scmp.eq.s32.totalorder %s17, 1
      %p35 = por %p33, %p34
      %p36 = scmp.ne.s32.totalorder %s25, %s26
      %p37 = scmp.eq.s32.totalorder %s17, 0
      %p38 = por %p36, %p37
      %p39 = scmp.ne.s32.totalorder %s25, %s26
      %p40 = scmp.eq.s32.totalorder %s18, 1
      %p41 = por %p39, %p40
      %p43 = scmp.ne.s32.totalorder %s26, %s42
      %p44 = scmp.eq.s32.totalorder %s18, 0
      %p45 = por %p43, %p44
      %s47 = sadd.s32 %s46, 1
      %p50 = scmp.eq.s32.totalorder %s12, 1
      %p51 = scmp.ne.s32.totalorder %s46, %s48
      %p52 = scmp.eq.s32.totalorder %s12, 0
      %p53 = por %p51, %p52
      %p54 = scmp.ne.s32.totalorder %s46, %s48
      %p55 = scmp.eq.s32.totalorder %s17, 1
      %p56 = por %p54, %p55
      %p57 = scmp.ne.s32.totalorder %s48, %s49
      %p58 = scmp.eq.s32.totalorder %s17, 0
      %p59 = por %p57, %p58
      %p60 = scmp.ne.s32.totalorder %s48, %s49
      %p61 = scmp.eq.s32.totalorder %s18, 1
      %p62 = por %p60, %p61
      %p64 = scmp.ne.s32.totalorder %s49, %s63
      %p65 = scmp.eq.s32.totalorder %s18, 0
      %p66 = por %p64, %p65
      %s68 = sadd.s32 %s67, 1
      %p71 = scmp.eq.s32.totalorder %s12, 1
      %p72 = scmp.ne.s32.totalorder %s67, %s69
      %p73 = scmp.eq.s32.totalorder %s12, 0
      %p74 = por %p72, %p73
      %p75 = scmp.ne.s32.totalorder %s67, %s69
      %p76 = scmp.eq.s32.totalorder %s17, 1
      %p77 = por %p75, %p76
      %p78 = scmp.ne.s32.totalorder %s69, %s70
      %p79 = scmp.eq.s32.totalorder %s17, 0
      %p80 = por %p78, %p79
      %p81 = scmp.ne.s32.totalorder %s69, %s70
      %p82 = scmp.eq.s32.totalorder %s18, 1
      %p83 = por %p81, %p82
      %p85 = scmp.ne.s32.totalorder %s70, %s84
      %p86 = scmp.eq.s32.totalorder %s18, 0
      %p87 = por %p85, %p86
      %s88 = ssub.s32 %s12, %s19
      %p89 = scmp.eq.s32.totalorder %s88, 0
      %s91 = sadd.s32 %s90, 1
      %s92 = scalar_select %p89, %s90, %s91
      %p95 = pneg %p89
      %p96 = scmp.eq.s32.totalorder %s12, 1
      %p97 = por %p95, %p96
      %p98 = scmp.ne.s32.totalorder %s90, %s93
      %p99 = scmp.eq.s32.totalorder %s12, 0
      %p100 = por %p98, %p99
      %p101 = scmp.ne.s32.totalorder %s90, %s93
      %p102 = scmp.eq.s32.totalorder %s17, 1
      %p103 = por %p101, %p102
      %p104 = scmp.ne.s32.totalorder %s93, %s94
      %p105 = scmp.eq.s32.totalorder %s17, 0
      %p106 = por %p104, %p105
      %p107 = scmp.ne.s32.totalorder %s93, %s94
      %p108 = scmp.eq.s32.totalorder %s18, 1
      %p109 = por %p107, %p108
      %p111 = scmp.ne.s32.totalorder %s94, %s110
      %p112 = scmp.eq.s32.totalorder %s18, 0
      %p113 = por %p111, %p112
      %p114 = scmp.le.s32.totalorder 1, %s12
      %p115 = scmp.lt.s32.totalorder %s12, 3
      %p116 = pnand %p114, %p115
      %p117 = pneg %p116
      // Predicated region
      $region9: #{character_cnn_forward.1} parent=5 // pred_check
        _
      $region10: #{character_cnn_forward.1} parent=5 // pred_check_branch
        %119 = sbr.rel (%p116) target = $region12
      $region11: #{character_cnn_forward.1} parent=5 // pred_region
        %s120 = ssub.s32 %s12, 1
        // Predicated region
        $region13: #{character_cnn_forward.1} parent=11 // pred_check
          %p121 = pneg %p59
        $region14: #{character_cnn_forward.1} parent=11 // pred_check_branch
          %123 = sbr.rel (%p121) target = $region16
        $region15: #{character_cnn_forward.1} parent=11 // pred_region
          _
        $region16: #{character_cnn_forward.1} parent=11 // pred_fallthru
          _
        // Predicated region
        $region17: #{character_cnn_forward.1} parent=11 // pred_check
          %p124 = pneg %p80
        $region18: #{character_cnn_forward.1} parent=11 // pred_check_branch
          %126 = sbr.rel (%p124) target = $region20
        $region19: #{character_cnn_forward.1} parent=11 // pred_region
          _
        $region20: #{character_cnn_forward.1} parent=11 // pred_fallthru
          _
      $region12: #{character_cnn_forward.1} parent=5 // pred_fallthru
        _
      %p127 = scmp.lt.s32.totalorder %s12, 2
      // Predicated region
      $region21: #{character_cnn_forward.1} parent=5 // pred_check
        %p128 = pneg %p127
      $region22: #{character_cnn_forward.1} parent=5 // pred_check_branch
        %130 = sbr.rel (%p128) target = $region24
      $region23: #{character_cnn_forward.1} parent=5 // pred_region
        // Predicated region
        $region25: #{character_cnn_forward.1} parent=23 // pred_check
          %p131 = pneg %p32
        $region26: #{character_cnn_forward.1} parent=23 // pred_check_branch
          %133 = sbr.rel (%p131) target = $region28
        $region27: #{character_cnn_forward.1} parent=23 // pred_region
          %s134 = smul.u32 8, %s12
          %p135 = scmp.lt.s32.totalorder %s134, 15
          %s136 = scalar_select %p135, %s134, 15
          %s137 = smul.addr %s136, 2
          %s138 = smul.addr %s137, 8
          %s139 = scalar_lea.vmem %s0, %s138
          %s140 = smul.u32 8, %s12
        $region28: #{character_cnn_forward.1} parent=23 // pred_fallthru
          _
      $region24: #{character_cnn_forward.1} parent=5 // pred_fallthru
        _
      %p141 = scmp.le.s32.totalorder 1, %s12
      %p142 = scmp.lt.s32.totalorder %s12, 3
      %p143 = pnand %p141, %p142
      %p144 = pneg %p143
      // Predicated region
      $region29: #{character_cnn_forward.1} parent=5 // pred_check
        _
      $region30: #{character_cnn_forward.1} parent=5 // pred_check_branch
        %146 = sbr.rel (%p143) target = $region32
      $region31: #{character_cnn_forward.1} parent=5 // pred_region
        %s147 = ssub.s32 %s12, 1
        %s148 = smul.u32 8, %s17
        %p149 = scmp.lt.s32.totalorder %s148, 15
        %s150 = scalar_select %p149, %s148, 15
        %s151 = smul.addr %s150, 2
        %s152 = smul.addr %s151, 8
        %s153 = scalar_lea.vmem %s0, %s152
        %p154 = pneg %p38
        %p155 = pneg %p35
        %p156 = pneg %p59
        %p157 = pneg %p56
        %p158 = pneg %p80
        %p159 = pneg %p77
        %p160 = pneg %p106
        %p161 = pneg %p103
        %s162 = sand.u32 %s93, 1
        %s163 = scalar_lea.sflag [#allocation3], %s162
        %s164 = sand.u32 %s93, 1
        %s165 = smul.addr %s164, 8
        %s166 = scalar_lea.vmem [#allocation2], %s165
        %s167 = smul.u32 8, %s17
        %p168 = scmp.lt.s32.totalorder %s167, 15
        %s169 = scalar_select %p168, %s167, 15
        %s170 = smul.addr %s169, 2
        %s171 = smul.addr %s170, 8
        %s172 = scalar_lea.vmem %s0, %s171
        %s173 = smul.u32 8, %s17
        %v174 = vld [vmem:[%s172] sm:$0xff]
        %v175 = vld [vmem:[%s172 + $0x8] sm:$0xff]
        %v176 = vld [vmem:[%s172 + $0x10] sm:$0xff]
        %v177 = vld [vmem:[%s172 + $0x18] sm:$0xff]
        %v178 = vld [vmem:[%s172 + $0x20] sm:$0xff]
        %v179 = vld [vmem:[%s172 + $0x28] sm:$0xff]
        %v180 = vld [vmem:[%s172 + $0x30] sm:$0xff]
        %v181 = vld [vmem:[%s172 + $0x38] sm:$0xff]
        %v182 = vld [vmem:[%s172 + $0x40] sm:$0xff]
        %v183 = vld [vmem:[%s172 + $0x48] sm:$0xff]
        %v184 = vld [vmem:[%s172 + $0x50] sm:$0xff]
        %v185 = vld [vmem:[%s172 + $0x58] sm:$0xff]
        %v186 = vld [vmem:[%s172 + $0x60] sm:$0xff]
        %v187 = vld [vmem:[%s172 + $0x68] sm:$0xff]
        %v188 = vld [vmem:[%s172 + $0x70] sm:$0xff]
        %v189 = vld [vmem:[%s172 + $0x78] sm:$0xff]
        %v190 = vld [vmem:[%s1] sm:$0xff]
        %v191 = vld [vmem:[%s1 + $0x8] sm:$0xff]
        %v192 = vld [vmem:[%s1 + $0x10] sm:$0xff]
        %v193 = vld [vmem:[%s1 + $0x18] sm:$0xff]
        %v194 = vld [vmem:[%s1 + $0x20] sm:$0xff]
        %v195 = vld [vmem:[%s1 + $0x28] sm:$0xff]
        %v196 = vld [vmem:[%s1 + $0x30] sm:$0xff]
        %v197 = vld [vmem:[%s1 + $0x38] sm:$0xff]
        %vm198 = vcmask 523264
        %v200 = vsel %vm198, %v174, 0
        %v203 = vsel %vm198, %v175, 0
        %v206 = vsel %vm198, %v176, 0
        %v209 = vsel %vm198, %v177, 0
        %v212 = vsel %vm198, %v178, 0
        %v215 = vsel %vm198, %v179, 0
        %v218 = vsel %vm198, %v180, 0
        %v221 = vsel %vm198, %v181, 0
        %v224 = vsel %vm198, %v182, 0
        %v227 = vsel %vm198, %v183, 0
        %v230 = vsel %vm198, %v184, 0
        %v233 = vsel %vm198, %v185, 0
        %v236 = vsel %vm198, %v186, 0
        %v239 = vsel %vm198, %v187, 0
        %v242 = vsel %vm198, %v188, 0
        %v245 = vsel %vm198, %v189, 0
        %247 = vmatprep.subr.mxu0 0.0
        %248 = vmatpush1.msra.mxu0 0.0
        %249 = vmatprep.subr.mxu0 0.0
        %250 = vmatpush1.msra.mxu0 0.0
        %251 = vmatprep.subr.mxu0 0.0
        %252 = vmatpush1.msra.mxu0 0.0
        %253 = vmatprep.subr.mxu0 0.0
        %254 = vmatpush1.msra.mxu0 0.0
        %255 = vmatprep.subr.mxu0 0.0
        %256 = vmatpush1.msra.mxu0 0.0
        %257 = vmatprep.subr.mxu0 0.0
        %258 = vmatpush1.msra.mxu0 0.0
        %259 = vmatprep.subr.mxu0 0.0
        %260 = vmatpush1.msra.mxu0 0.0
        %261 = vmatprep.subr.mxu0 0.0
        %262 = vmatpush1.msra.mxu0 0.0
        %263 = vmatprep.subr.mxu0 0.0
        %264 = vmatpush1.msra.mxu0 %v197
        %265 = vmatprep.subr.mxu0 0.0
        %266 = vmatpush1.msra.mxu0 %v196
        %267 = vmatprep.subr.mxu0 0.0
        %268 = vmatpush1.msra.mxu0 %v195
        %269 = vmatprep.subr.mxu0 0.0
        %270 = vmatpush1.msra.mxu0 %v194
        %271 = vmatprep.subr.mxu0 0.0
        %272 = vmatpush1.msra.mxu0 %v193
        %273 = vmatprep.subr.mxu0 0.0
        %274 = vmatpush1.msra.mxu0 %v192
        %275 = vmatprep.subr.mxu0 0.0
        %276 = vmatpush1.msra.mxu0 %v191
        %277 = vmatprep.subr.mxu0 0.0
        %278 = vmatpush1.msra.mxu0 %v190
        %279 = vmatprep.subr.mxu0 0.0
        %280 = vmatpush2.msra.mxu0 0.0
        %281 = vmatprep.subr.mxu0 0.0
        %282 = vmatpush2.msra.mxu0 0.0
        %283 = vmatprep.subr.mxu0 0.0
        %284 = vmatpush2.msra.mxu0 0.0
        %285 = vmatprep.subr.mxu0 0.0
        %286 = vmatpush2.msra.mxu0 0.0
        %287 = vmatprep.subr.mxu0 0.0
        %288 = vmatpush2.msra.mxu0 0.0
        %289 = vmatprep.subr.mxu0 0.0
        %290 = vmatpush2.msra.mxu0 0.0
        %291 = vmatprep.subr.mxu0 0.0
        %292 = vmatpush2.msra.mxu0 0.0
        %293 = vmatprep.subr.mxu0 0.0
        %294 = vmatpush2.msra.mxu0 0.0
        %295 = vmatprep.subr.mxu0 0.0
        %296 = vmatpush2.msra.mxu0 0.0
        %297 = vmatprep.subr.mxu0 0.0
        %298 = vmatpush2.msra.mxu0 0.0
        %299 = vmatprep.subr.mxu0 0.0
        %300 = vmatpush2.msra.mxu0 0.0
        %301 = vmatprep.subr.mxu0 0.0
        %302 = vmatpush2.msra.mxu0 0.0
        %303 = vmatprep.subr.mxu0 0.0
        %304 = vmatpush2.msra.mxu0 0.0
        %305 = vmatprep.subr.mxu0 0.0
        %306 = vmatpush2.msra.mxu0 0.0
        %307 = vmatprep.subr.mxu0 0.0
        %308 = vmatpush2.msra.mxu0 0.0
        %309 = vmatprep.subr.mxu0 0.0
        %310 = vmatpush2.msra.mxu0 0.0
        %311 = vmatprep.mubr.f32.mxu0 0.0
        %312 = vmatmul.mubr.f32.gmra.mxu0 %v200
        %v313 = vpop.f32.mrf.mxu0
        %v314 = vadd.f32 0.0, %v313
        %v315 = vpop.f32.mrf.mxu0
        %316 = vmatprep.mubr.f32.mxu0 0.0
        %317 = vmatmul.mubr.f32.gmra.mxu0 %v203
        %v318 = vpop.f32.mrf.mxu0
        %v319 = vadd.f32 0.0, %v318
        %v320 = vpop.f32.mrf.mxu0
        %321 = vmatprep.mubr.f32.mxu0 0.0
        %322 = vmatmul.mubr.f32.gmra.mxu0 %v206
        %v323 = vpop.f32.mrf.mxu0
        %v324 = vadd.f32 0.0, %v323
        %v325 = vpop.f32.mrf.mxu0
        %326 = vmatprep.mubr.f32.mxu0 0.0
        %327 = vmatmul.mubr.f32.gmra.mxu0 %v209
        %v328 = vpop.f32.mrf.mxu0
        %v329 = vadd.f32 0.0, %v328
        %v330 = vpop.f32.mrf.mxu0
        %331 = vmatprep.mubr.f32.mxu0 0.0
        %332 = vmatmul.mubr.f32.gmra.mxu0 %v212
        %v333 = vpop.f32.mrf.mxu0
        %v334 = vadd.f32 0.0, %v333
        %v335 = vpop.f32.mrf.mxu0
        %336 = vmatprep.mubr.f32.mxu0 0.0
        %337 = vmatmul.mubr.f32.gmra.mxu0 %v215
        %v338 = vpop.f32.mrf.mxu0
        %v339 = vadd.f32 0.0, %v338
        %v340 = vpop.f32.mrf.mxu0
        %341 = vmatprep.mubr.f32.mxu0 0.0
        %342 = vmatmul.mubr.f32.gmra.mxu0 %v218
        %v343 = vpop.f32.mrf.mxu0
        %v344 = vadd.f32 0.0, %v343
        %v345 = vpop.f32.mrf.mxu0
        %346 = vmatprep.mubr.f32.mxu0 0.0
        %347 = vmatmul.mubr.f32.gmra.mxu0 %v221
        %v348 = vpop.f32.mrf.mxu0
        %v349 = vadd.f32 0.0, %v348
        %v350 = vpop.f32.mrf.mxu0
        %351 = vmatprep.mubr.f32.mxu0 0.0
        %352 = vmatmul.mubr.f32.gmra.mxu0 %v224
        %v353 = vpop.f32.mrf.mxu0
        %v354 = vadd.f32 0.0, %v353
        %v355 = vpop.f32.mrf.mxu0
        %356 = vmatprep.mubr.f32.mxu0 0.0
        %357 = vmatmul.mubr.f32.gmra.mxu0 %v227
        %v358 = vpop.f32.mrf.mxu0
        %v359 = vadd.f32 0.0, %v358
        %v360 = vpop.f32.mrf.mxu0
        %361 = vmatprep.mubr.f32.mxu0 0.0
        %362 = vmatmul.mubr.f32.gmra.mxu0 %v230
        %v363 = vpop.f32.mrf.mxu0
        %v364 = vadd.f32 0.0, %v363
        %v365 = vpop.f32.mrf.mxu0
        %366 = vmatprep.mubr.f32.mxu0 0.0
        %367 = vmatmul.mubr.f32.gmra.mxu0 %v233
        %v368 = vpop.f32.mrf.mxu0
        %v369 = vadd.f32 0.0, %v368
        %v370 = vpop.f32.mrf.mxu0
        %371 = vmatprep.mubr.f32.mxu0 0.0
        %372 = vmatmul.mubr.f32.gmra.mxu0 %v236
        %v373 = vpop.f32.mrf.mxu0
        %v374 = vadd.f32 0.0, %v373
        %v375 = vpop.f32.mrf.mxu0
        %376 = vmatprep.mubr.f32.mxu0 0.0
        %377 = vmatmul.mubr.f32.gmra.mxu0 %v239
        %v378 = vpop.f32.mrf.mxu0
        %v379 = vadd.f32 0.0, %v378
        %v380 = vpop.f32.mrf.mxu0
        %381 = vmatprep.mubr.f32.mxu0 0.0
        %382 = vmatmul.mubr.f32.gmra.mxu0 %v242
        %v383 = vpop.f32.mrf.mxu0
        %v384 = vadd.f32 0.0, %v383
        %v385 = vpop.f32.mrf.mxu0
        %386 = vmatprep.mubr.f32.mxu0 0.0
        %387 = vmatmul.mubr.f32.gmra.mxu0 %v245
        %v388 = vpop.f32.mrf.mxu0
        %v389 = vadd.f32 0.0, %v388
        %v390 = vpop.f32.mrf.mxu0
        %391 = vdwg.mxu0
        %vm408 = vcmask 1046528
        %v409 = vrot.slane %v314, 1
        %v410 = vrot.slane %v319, 1
        %v411 = vsel %vm408, %v409, %v410
        %v412 = vrot.slane %v324, 1
        %v413 = vrot.slane %v329, 1
        %v414 = vsel %vm408, %v412, %v413
        %v415 = vrot.slane %v334, 1
        %v416 = vrot.slane %v339, 1
        %v417 = vsel %vm408, %v415, %v416
        %v418 = vrot.slane %v344, 1
        %v419 = vrot.slane %v349, 1
        %v420 = vsel %vm408, %v418, %v419
        %v421 = vrot.slane %v354, 1
        %v422 = vrot.slane %v359, 1
        %v423 = vsel %vm408, %v421, %v422
        %v424 = vrot.slane %v364, 1
        %v425 = vrot.slane %v369, 1
        %v426 = vsel %vm408, %v424, %v425
        %v427 = vrot.slane %v374, 1
        %v428 = vrot.slane %v379, 1
        %v429 = vsel %vm408, %v427, %v428
        %v430 = vrot.slane %v384, 1
        %v431 = vrot.slane %v389, 1
        %v432 = vsel %vm408, %v430, %v431
        %433 = vrot.lane.b32.xlu0 %v411, 96
        %v434 = vpop.permute.xlu0 %433
        %435 = vrot.lane.b32.xlu0 %v410, 96
        %v436 = vpop.permute.xlu0 %435
        %437 = vrot.lane.b32.xlu0 %v414, 96
        %v438 = vpop.permute.xlu0 %437
        %439 = vrot.lane.b32.xlu0 %v413, 96
        %v440 = vpop.permute.xlu0 %439
        %441 = vrot.lane.b32.xlu0 %v417, 96
        %v442 = vpop.permute.xlu0 %441
        %443 = vrot.lane.b32.xlu0 %v416, 96
        %v444 = vpop.permute.xlu0 %443
        %445 = vrot.lane.b32.xlu0 %v420, 96
        %v446 = vpop.permute.xlu0 %445
        %447 = vrot.lane.b32.xlu0 %v419, 96
        %v448 = vpop.permute.xlu0 %447
        %449 = vrot.lane.b32.xlu0 %v423, 96
        %v450 = vpop.permute.xlu0 %449
        %451 = vrot.lane.b32.xlu0 %v422, 96
        %v452 = vpop.permute.xlu0 %451
        %453 = vrot.lane.b32.xlu0 %v426, 96
        %v454 = vpop.permute.xlu0 %453
        %455 = vrot.lane.b32.xlu0 %v425, 96
        %v456 = vpop.permute.xlu0 %455
        %457 = vrot.lane.b32.xlu0 %v429, 96
        %v458 = vpop.permute.xlu0 %457
        %459 = vrot.lane.b32.xlu0 %v428, 96
        %v460 = vpop.permute.xlu0 %459
        %461 = vrot.lane.b32.xlu0 %v432, 96
        %v462 = vpop.permute.xlu0 %461
        %463 = vrot.lane.b32.xlu0 %v431, 96
        %v464 = vpop.permute.xlu0 %463
        %v481 = vadd.f32 %v314, %v434
        %v482 = vadd.f32 %v319, %v436
        %v483 = vadd.f32 %v324, %v438
        %v484 = vadd.f32 %v329, %v440
        %v485 = vadd.f32 %v334, %v442
        %v486 = vadd.f32 %v339, %v444
        %v487 = vadd.f32 %v344, %v446
        %v488 = vadd.f32 %v349, %v448
        %v489 = vadd.f32 %v354, %v450
        %v490 = vadd.f32 %v359, %v452
        %v491 = vadd.f32 %v364, %v454
        %v492 = vadd.f32 %v369, %v456
        %v493 = vadd.f32 %v374, %v458
        %v494 = vadd.f32 %v379, %v460
        %v495 = vadd.f32 %v384, %v462
        %v496 = vadd.f32 %v389, %v464
        %vm497 = vcmask 1045504
        %v498 = vrot.slane %v314, 2
        %v499 = vrot.slane %v319, 2
        %v500 = vsel %vm497, %v498, %v499
        %v501 = vrot.slane %v324, 2
        %v502 = vrot.slane %v329, 2
        %v503 = vsel %vm497, %v501, %v502
        %v504 = vrot.slane %v334, 2
        %v505 = vrot.slane %v339, 2
        %v506 = vsel %vm497, %v504, %v505
        %v507 = vrot.slane %v344, 2
        %v508 = vrot.slane %v349, 2
        %v509 = vsel %vm497, %v507, %v508
        %v510 = vrot.slane %v354, 2
        %v511 = vrot.slane %v359, 2
        %v512 = vsel %vm497, %v510, %v511
        %v513 = vrot.slane %v364, 2
        %v514 = vrot.slane %v369, 2
        %v515 = vsel %vm497, %v513, %v514
        %v516 = vrot.slane %v374, 2
        %v517 = vrot.slane %v379, 2
        %v518 = vsel %vm497, %v516, %v517
        %v519 = vrot.slane %v384, 2
        %v520 = vrot.slane %v389, 2
        %v521 = vsel %vm497, %v519, %v520
        %522 = vrot.lane.b32.xlu0 %v500, 64
        %v523 = vpop.permute.xlu0 %522
        %524 = vrot.lane.b32.xlu0 %v499, 64
        %v525 = vpop.permute.xlu0 %524
        %526 = vrot.lane.b32.xlu0 %v503, 64
        %v527 = vpop.permute.xlu0 %526
        %528 = vrot.lane.b32.xlu0 %v502, 64
        %v529 = vpop.permute.xlu0 %528
        %530 = vrot.lane.b32.xlu0 %v506, 64
        %v531 = vpop.permute.xlu0 %530
        %532 = vrot.lane.b32.xlu0 %v505, 64
        %v533 = vpop.permute.xlu0 %532
        %534 = vrot.lane.b32.xlu0 %v509, 64
        %v535 = vpop.permute.xlu0 %534
        %536 = vrot.lane.b32.xlu0 %v508, 64
        %v537 = vpop.permute.xlu0 %536
        %538 = vrot.lane.b32.xlu0 %v512, 64
        %v539 = vpop.permute.xlu0 %538
        %540 = vrot.lane.b32.xlu0 %v511, 64
        %v541 = vpop.permute.xlu0 %540
        %542 = vrot.lane.b32.xlu0 %v515, 64
        %v543 = vpop.permute.xlu0 %542
        %544 = vrot.lane.b32.xlu0 %v514, 64
        %v545 = vpop.permute.xlu0 %544
        %546 = vrot.lane.b32.xlu0 %v518, 64
        %v547 = vpop.permute.xlu0 %546
        %548 = vrot.lane.b32.xlu0 %v517, 64
        %v549 = vpop.permute.xlu0 %548
        %550 = vrot.lane.b32.xlu0 %v521, 64
        %v551 = vpop.permute.xlu0 %550
        %552 = vrot.lane.b32.xlu0 %v520, 64
        %v553 = vpop.permute.xlu0 %552
        %v570 = vadd.f32 %v481, %v523
        %v571 = vadd.f32 %v482, %v525
        %v572 = vadd.f32 %v483, %v527
        %v573 = vadd.f32 %v484, %v529
        %v574 = vadd.f32 %v485, %v531
        %v575 = vadd.f32 %v486, %v533
        %v576 = vadd.f32 %v487, %v535
        %v577 = vadd.f32 %v488, %v537
        %v578 = vadd.f32 %v489, %v539
        %v579 = vadd.f32 %v490, %v541
        %v580 = vadd.f32 %v491, %v543
        %v581 = vadd.f32 %v492, %v545
        %v582 = vadd.f32 %v493, %v547
        %v583 = vadd.f32 %v494, %v549
        %v584 = vadd.f32 %v495, %v551
        %v585 = vadd.f32 %v496, %v553
        %vm586 = vcmask 261120
        %v587 = vsel %vm586, %v570, -inf
        %vm588 = vcmask 259072
        %v589 = vsel %vm588, %v571, -inf
        %v590 = vmax.f32 %v587, %v589
        %v591 = vrot.slane %v590, 4
        %v592 = vmax.f32 %v590, %v591
        %v593 = vrot.slane %v592, 2
        %v594 = vmax.f32 %v592, %v593
        %v595 = vrot.slane %v594, 1
        %v596 = vmax.f32 %v594, %v595
        %v597 = vsel %vm586, %v572, -inf
        %v598 = vsel %vm588, %v573, -inf
        %v599 = vmax.f32 %v597, %v598
        %v600 = vrot.slane %v599, 4
        %v601 = vmax.f32 %v599, %v600
        %v602 = vrot.slane %v601, 2
        %v603 = vmax.f32 %v601, %v602
        %v604 = vrot.slane %v603, 1
        %v605 = vmax.f32 %v603, %v604
        %v606 = vsel %vm586, %v574, -inf
        %v607 = vsel %vm588, %v575, -inf
        %v608 = vmax.f32 %v606, %v607
        %v609 = vrot.slane %v608, 4
        %v610 = vmax.f32 %v608, %v609
        %v611 = vrot.slane %v610, 2
        %v612 = vmax.f32 %v610, %v611
        %v613 = vrot.slane %v612, 1
        %v614 = vmax.f32 %v612, %v613
        %v615 = vsel %vm586, %v576, -inf
        %v616 = vsel %vm588, %v577, -inf
        %v617 = vmax.f32 %v615, %v616
        %v618 = vrot.slane %v617, 4
        %v619 = vmax.f32 %v617, %v618
        %v620 = vrot.slane %v619, 2
        %v621 = vmax.f32 %v619, %v620
        %v622 = vrot.slane %v621, 1
        %v623 = vmax.f32 %v621, %v622
        %v624 = vsel %vm586, %v578, -inf
        %v625 = vsel %vm588, %v579, -inf
        %v626 = vmax.f32 %v624, %v625
        %v627 = vrot.slane %v626, 4
        %v628 = vmax.f32 %v626, %v627
        %v629 = vrot.slane %v628, 2
        %v630 = vmax.f32 %v628, %v629
        %v631 = vrot.slane %v630, 1
        %v632 = vmax.f32 %v630, %v631
        %v633 = vsel %vm586, %v580, -inf
        %v634 = vsel %vm588, %v581, -inf
        %v635 = vmax.f32 %v633, %v634
        %v636 = vrot.slane %v635, 4
        %v637 = vmax.f32 %v635, %v636
        %v638 = vrot.slane %v637, 2
        %v639 = vmax.f32 %v637, %v638
        %v640 = vrot.slane %v639, 1
        %v641 = vmax.f32 %v639, %v640
        %v642 = vsel %vm586, %v582, -inf
        %v643 = vsel %vm588, %v583, -inf
        %v644 = vmax.f32 %v642, %v643
        %v645 = vrot.slane %v644, 4
        %v646 = vmax.f32 %v644, %v645
        %v647 = vrot.slane %v646, 2
        %v648 = vmax.f32 %v646, %v647
        %v649 = vrot.slane %v648, 1
        %v650 = vmax.f32 %v648, %v649
        %v651 = vsel %vm586, %v584, -inf
        %v652 = vsel %vm588, %v585, -inf
        %v653 = vmax.f32 %v651, %v652
        %v654 = vrot.slane %v653, 4
        %v655 = vmax.f32 %v653, %v654
        %v656 = vrot.slane %v655, 2
        %v657 = vmax.f32 %v655, %v656
        %v658 = vrot.slane %v657, 1
        %v659 = vmax.f32 %v657, %v658
        %660 = vrot.lane.b32.xlu0 %v409, 96
        %v661 = vpop.permute.xlu0 %660
        %662 = vrot.lane.b32.xlu0 %v412, 96
        %v663 = vpop.permute.xlu0 %662
        %664 = vrot.lane.b32.xlu0 %v415, 96
        %v665 = vpop.permute.xlu0 %664
        %666 = vrot.lane.b32.xlu0 %v418, 96
        %v667 = vpop.permute.xlu0 %666
        %668 = vrot.lane.b32.xlu0 %v421, 96
        %v669 = vpop.permute.xlu0 %668
        %670 = vrot.lane.b32.xlu0 %v424, 96
        %v671 = vpop.permute.xlu0 %670
        %672 = vrot.lane.b32.xlu0 %v427, 96
        %v673 = vpop.permute.xlu0 %672
        %674 = vrot.lane.b32.xlu0 %v430, 96
        %v675 = vpop.permute.xlu0 %674
        %v684 = vadd.f32 %v314, %v661
        %v685 = vadd.f32 %v324, %v663
        %v686 = vadd.f32 %v334, %v665
        %v687 = vadd.f32 %v344, %v667
        %v688 = vadd.f32 %v354, %v669
        %v689 = vadd.f32 %v364, %v671
        %v690 = vadd.f32 %v374, %v673
        %v691 = vadd.f32 %v384, %v675
        %700 = vrot.lane.b32.xlu0 %v684, 96
        %v701 = vpop.permute.xlu0 %700
        %702 = vrot.lane.b32.xlu0 %v685, 96
        %v703 = vpop.permute.xlu0 %702
        %704 = vrot.lane.b32.xlu0 %v686, 96
        %v705 = vpop.permute.xlu0 %704
        %706 = vrot.lane.b32.xlu0 %v687, 96
        %v707 = vpop.permute.xlu0 %706
        %708 = vrot.lane.b32.xlu0 %v688, 96
        %v709 = vpop.permute.xlu0 %708
        %710 = vrot.lane.b32.xlu0 %v689, 96
        %v711 = vpop.permute.xlu0 %710
        %712 = vrot.lane.b32.xlu0 %v690, 96
        %v713 = vpop.permute.xlu0 %712
        %714 = vrot.lane.b32.xlu0 %v691, 96
        %v715 = vpop.permute.xlu0 %714
        %v724 = vmax.f32 %v596, %v701
        %v725 = vmax.f32 %v605, %v703
        %v726 = vmax.f32 %v614, %v705
        %v727 = vmax.f32 %v623, %v707
        %v728 = vmax.f32 %v632, %v709
        %v729 = vmax.f32 %v641, %v711
        %v730 = vmax.f32 %v650, %v713
        %v731 = vmax.f32 %v659, %v715
        %v740 = vrot.slane %v482, 6
        %v741 = vrot.slane %v484, 6
        %v742 = vrot.slane %v486, 6
        %v743 = vrot.slane %v488, 6
        %v744 = vrot.slane %v490, 6
        %v745 = vrot.slane %v492, 6
        %v746 = vrot.slane %v494, 6
        %v747 = vrot.slane %v496, 6
        %v756 = vmax.f32 %v724, %v740
        %v757 = vmax.f32 %v725, %v741
        %v758 = vmax.f32 %v726, %v742
        %v759 = vmax.f32 %v727, %v743
        %v760 = vmax.f32 %v728, %v744
        %v761 = vmax.f32 %v729, %v745
        %v762 = vmax.f32 %v730, %v746
        %v763 = vmax.f32 %v731, %v747
        %v764 = vld [vmem:[%s2] sm:$0x1]
        %v766 = vlaneseq
        %v767 = vshrl.u32 %v766, 7
        %v768 = vsub.s32 0, %v767
        %v769 = vrot.slane %v764, %v768
        %v771 = vadd.f32 %v756, %v769
        %v772 = vadd.f32 %v757, %v769
        %v773 = vadd.f32 %v758, %v769
        %v774 = vadd.f32 %v759, %v769
        %v775 = vadd.f32 %v760, %v769
        %v776 = vadd.f32 %v761, %v769
        %v777 = vadd.f32 %v762, %v769
        %v778 = vadd.f32 %v763, %v769
        %v779 = vmax.f32 %v771, 0.0
        %v780 = vmax.f32 %v772, 0.0
        %v781 = vmax.f32 %v773, 0.0
        %v782 = vmax.f32 %v774, 0.0
        %v783 = vmax.f32 %v775, 0.0
        %v784 = vmax.f32 %v776, 0.0
        %v785 = vmax.f32 %v777, 0.0
        %v786 = vmax.f32 %v778, 0.0
        %v795 = vrot.slane %v780, 7
        %vm796 = vcmask 1041409
        %v797 = vsel %vm796, %v795, %v779
        %v798 = vrot.slane %v781, 6
        %vm799 = vcmask 1042434
        %v800 = vsel %vm799, %v798, %v797
        %v801 = vrot.slane %v782, 5
        %vm802 = vcmask 1043459
        %v803 = vsel %vm802, %v801, %v800
        %v804 = vrot.slane %v783, 4
        %vm805 = vcmask 1044484
        %v806 = vsel %vm805, %v804, %v803
        %v807 = vrot.slane %v784, 3
        %vm808 = vcmask 1045509
        %v809 = vsel %vm808, %v807, %v806
        %v810 = vrot.slane %v785, 2
        %vm811 = vcmask 1046534
        %v812 = vsel %vm811, %v810, %v809
        %v813 = vrot.slane %v786, 1
        %vm814 = vcmask 1047559
        %v815 = vsel %vm814, %v813, %v812
        %817 = vst.msk [vmem:[%s166] sm:$0xff] %vm586, %v815
        %s818 = sand.u32 %s93, 1
        %s819 = scalar_lea.sflag [#allocation3], %s818
        %s820 = sand.u32 %s93, 1
        %s821 = smul.addr %s820, 8
        %s822 = scalar_lea.vmem [#allocation2], %s821
        // Predicated region
        $region33: #{character_cnn_forward.1} parent=31 // pred_check
          %p823 = pneg %p103
        $region34: #{character_cnn_forward.1} parent=31 // pred_check_branch
          %825 = sbr.rel (%p823) target = $region36
        $region35: #{character_cnn_forward.1} parent=31 // pred_region
          %s827 = ssub.s32 128, 128
          %828 = vsyncadd %s819, %s827
          %s829 = smul.addr %s17, 128
          %s830 = scalar_lea.hbm %s3, %s829
          %s832 = sshll.u32 %s822, 4
          %s833 = int_to_ptr.vmem [resolvable:$true] %s832
          %835 = dma.vmem_to_hbm [thread:$0]  %s833, 128, %s830, %s819
        $region36: #{character_cnn_forward.1} parent=31 // pred_fallthru
          _
      $region32: #{character_cnn_forward.1} parent=5 // pred_fallthru
        _
      %p836 = scmp.le.s32.totalorder 2, %s12
      // Predicated region
      $region37: #{character_cnn_forward.1} parent=5 // pred_check
        %p837 = pneg %p836
      $region38: #{character_cnn_forward.1} parent=5 // pred_check_branch
        %839 = sbr.rel (%p837) target = $region40
      $region39: #{character_cnn_forward.1} parent=5 // pred_region
        %s840 = ssub.s32 %s12, 2
        // Predicated region
        $region41: #{character_cnn_forward.1} parent=39 // pred_check
          %p841 = pneg %p109
        $region42: #{character_cnn_forward.1} parent=39 // pred_check_branch
          %843 = sbr.rel (%p841) target = $region44
        $region43: #{character_cnn_forward.1} parent=39 // pred_region
          %s844 = sand.u32 %s94, 1
          %s845 = scalar_lea.sflag [#allocation3], %s844
          %s846 = sand.u32 %s94, 1
          %s847 = smul.addr %s846, 8
          %s848 = scalar_lea.vmem [#allocation2], %s847
          %849 = dma.done %s845, 128
        $region44: #{character_cnn_forward.1} parent=39 // pred_fallthru
          _
      $region40: #{character_cnn_forward.1} parent=5 // pred_fallthru
        _
    $region6: #{character_cnn_forward.1} parent=1 // loop_footer
      %s16 = sadd.s32 1, %s12
    $region7: #{character_cnn_forward.1} parent=1 // loop_footer_branch
      %11 = sbr.rel target = $region3
    $region8: #{character_cnn_forward.1} parent=1 // loop_exit
      _
    %850 = vsyncpa [#allocation3], 1
    %s851 = scalar_lea.sflag [#allocation3], 1
    %852 = vsyncpa %s851, 1

</llo_original>
